<compile_context>
chip_gen: v6e
topology: v6e:2x2x1
jax: 0.10.0
libtpu: 0.0.40
codegen_flags: <defaults>
</compile_context>

<pallas_src>
import math
from functools import partial

import jax
import jax.numpy as jnp
from jax import lax
from jax.experimental import pallas as pl
from jax.experimental.pallas import tpu as pltpu


def _round_up(x, m):
    return ((x + m - 1) // m) * m


def _vmem_capacity_bytes():
    try:
        return int(pltpu.get_tpu_info().vmem_capacity_bytes)
    except Exception:
        return 64 << 20  # conservative (v7x-sized) fallback


def _vit_intermediate_kernel(x_ref, w_ref, b_ref, o_ref, *, approximate):
    """One (tm, tn) output tile: o = gelu(x @ w + b).

    x_ref: (tm, H)   activation row tile (full hidden dim)
    w_ref: (H, tn)   weight column tile (streamed by BlockSpec)
    b_ref: (1, tn)   bias column tile
    o_ref: (tm, tn)  output tile
    """
    acc = jnp.dot(x_ref[...], w_ref[...], preferred_element_type=jnp.float32)
    acc = acc + b_ref[...].astype(jnp.float32)
    if approximate:
        # tanh-form GELU: transcendental lands on the EUP slot (opt-in).
        out = jax.nn.gelu(acc, approximate=True)
    else:
        # Exact erf GELU, matching HF ViT's default hidden_act="gelu".
        out = 0.5 * acc * (1.0 + lax.erf(acc * (1.0 / math.sqrt(2.0))))
    o_ref[...] = out.astype(o_ref.dtype)


@partial(jax.jit, static_argnames=("tm", "tn", "compute_dtype",
                                   "approximate_gelu", "vmem_cap"))
def _vit_intermediate_impl(hidden_states, weight, bias, *, tm, tn,
                           compute_dtype, approximate_gelu, vmem_cap):
    B, S, H = hidden_states.shape
    Hw, I = weight.shape
    assert Hw == H, "weight must be [hidden, intermediate]"
    M = B * S

    out_dtype = hidden_states.dtype
    if compute_dtype is None:
        compute_dtype = jnp.dtype(out_dtype)

    # Sublane packing of the compute dtype (8 for f32, 16 for bf16, ...).
    sublane = max(8, 32 // jnp.dtype(compute_dtype).itemsize)
    tm_eff = min(_round_up(max(tm, sublane), sublane), _round_up(M, sublane))
    tn_eff = min(_round_up(max(tn, 128), 128), _round_up(I, 128))

    num_i = pl.cdiv(M, tm_eff)
    num_j = pl.cdiv(I, tn_eff)

    # Cast at the boundary: bf16 operands feed the MXU at full rate; the
    # matmul still accumulates in f32 and the GELU epilogue runs in f32.
    x2d = hidden_states.reshape(M, H).astype(compute_dtype)
    w2d = weight.astype(compute_dtype)
    b2d = bias.reshape(1, I)

    itm = jnp.dtype(compute_dtype).itemsize
    itm_b = b2d.dtype.itemsize
    itm_o = jnp.dtype(out_dtype).itemsize

    # Pick the grid order that minimizes HBM traffic: with columns outermost
    # each weight column tile is DMA'd once and activations re-stream num_j
    # times; with rows outermost it's the reverse.
    cols_outer_bytes = M * H * itm * num_j + H * I * itm
    rows_outer_bytes = M * H * itm + H * I * itm * num_i
    cols_outer = cols_outer_bytes <= rows_outer_bytes

    if cols_outer:
        grid = (num_j, num_i)
        x_spec = pl.BlockSpec((tm_eff, H), lambda j, i: (i, 0))
        w_spec = pl.BlockSpec((H, tn_eff), lambda j, i: (0, j))
        b_spec = pl.BlockSpec((1, tn_eff), lambda j, i: (0, j))
        o_spec = pl.BlockSpec((tm_eff, tn_eff), lambda j, i: (i, j))
    else:
        grid = (num_i, num_j)
        x_spec = pl.BlockSpec((tm_eff, H), lambda i, j: (i, 0))
        w_spec = pl.BlockSpec((H, tn_eff), lambda i, j: (0, j))
        b_spec = pl.BlockSpec((1, tn_eff), lambda i, j: (0, j))
        o_spec = pl.BlockSpec((tm_eff, tn_eff), lambda i, j: (i, j))

    # VMEM budget: double-buffered x / weight-column / bias / output tiles,
    # plus headroom; capped below the physical VMEM of this TPU generation.
    vmem_bytes = (
        2 * tm_eff * H * itm
        + 2 * H * tn_eff * itm
        + 2 * tn_eff * itm_b
        + 2 * tm_eff * tn_eff * itm_o
        + (4 << 20)
    )
    vmem_limit = int(min(max(vmem_bytes, 32 << 20), vmem_cap - (8 << 20)))

    cost = pl.CostEstimate(
        flops=2 * M * H * I,
        transcendentals=M * I,
        bytes_accessed=int(min(cols_outer_bytes, rows_outer_bytes)
                           + I * itm_b + M * I * itm_o),
    )

    out2d = pl.pallas_call(
        partial(_vit_intermediate_kernel, approximate=approximate_gelu),
        out_shape=jax.ShapeDtypeStruct((M, I), out_dtype),
        grid_spec=pltpu.PrefetchScalarGridSpec(
            num_scalar_prefetch=0,
            grid=grid,
            in_specs=[x_spec, w_spec, b_spec],
            out_specs=o_spec,
        ),
        compiler_params=pltpu.CompilerParams(
            dimension_semantics=("parallel", "parallel"),
            vmem_limit_bytes=vmem_limit,
        ),
        cost_estimate=cost,
    )(x2d, w2d, b2d)

    return out2d.reshape(B, S, I)


def vit_intermediate(hidden_states, weight, bias, *, tm=None, tn=None,
                     compute_dtype=jnp.bfloat16, approximate_gelu=False):
    """hidden_states: [B, S, H]; weight: [H, I]; bias: [I] -> [B, S, I]."""
    vmem_cap = _vmem_capacity_bytes()
    if tn is None:
        # Bigger lane-dense output tiles where VMEM allows (v5e/v6e: 128 MiB),
        # modest tiles on v7x (64 MiB).
        tn = 1024 if vmem_cap >= (96 << 20) else 512
    if tm is None:
        tm = 256
    cd = None if compute_dtype is None else jnp.dtype(compute_dtype)
    return _vit_intermediate_impl(
        hidden_states, weight, bias, tm=int(tm), tn=int(tn),
        compute_dtype=cd, approximate_gelu=bool(approximate_gelu),
        vmem_cap=int(vmem_cap))


def reference(hidden_states, weight, bias):
    y = jnp.einsum("bsh,hi->bsi", hidden_states, weight) + bias
    return jax.nn.gelu(y, approximate=False)


if __name__ == "__main__":
    # Small ViT-like config: batch=2, seq=9 (exercises ragged row tiles, like
    # S=197), hidden=32, intermediate=128 (= 4 * hidden).
    B, S, H, I = 2, 9, 32, 128

    key = jax.random.PRNGKey(0)
    kx, kw, kb = jax.random.split(key, 3)

    hidden_states = jax.random.normal(kx, (B, S, H), dtype=jnp.float32)
    # Deterministic "nn.Linear"-style init (uniform in +/- 1/sqrt(H)).
    bound = 1.0 / math.sqrt(H)
    weight = jax.random.uniform(kw, (H, I), jnp.float32, -bound, bound)
    bias = jax.random.uniform(kb, (I,), jnp.float32, -bound, bound)

    ref = reference(hidden_states, weight, bias)

    # Exact path (f32 compute, erf GELU): tight tolerance vs reference.
    out_f32 = jax.block_until_ready(
        vit_intermediate(hidden_states, weight, bias,
                         compute_dtype=jnp.float32))
    assert out_f32.shape == (B, S, I)
    assert jnp.allclose(out_f32, ref, atol=2e-5, rtol=2e-5), "f32 mismatch"

    # Default fast path (bf16 MXU operands, f32 accumulation): looser tol.
    out_fast = jax.block_until_ready(
        vit_intermediate(hidden_states, weight, bias))
    assert out_fast.shape == (B, S, I)
    assert jnp.allclose(out_fast, ref, atol=5e-2, rtol=5e-2), "bf16 mismatch"

    print("KERNEL_OK")
</pallas_src>

<mosaic_0001>
module attributes {stable_mosaic.version = 11 : i64} {
  func.func @_vit_intermediate_kernel(%arg0: i32, %arg1: i32, %arg2: memref<24x32xf32, #tpu.memory_space<vmem>>, %arg3: memref<32x128xf32, #tpu.memory_space<vmem>>, %arg4: memref<1x128xf32, #tpu.memory_space<vmem>>, %arg5: memref<24x128xf32, #tpu.memory_space<vmem>>) attributes {dimension_semantics = [#tpu.dimension_semantics<parallel>, #tpu.dimension_semantics<parallel>], iteration_bounds = array<i64: 1, 1>, scalar_prefetch = 0 : i64, scratch_operands = 0 : i64, tpu.core_type = #tpu.core_type<tc>, window_params = [{transform_indices = @transform_0, window_bounds = array<i64: 24, 32>}, {transform_indices = @transform_1, window_bounds = array<i64: 32, 128>}, {transform_indices = @transform_2, window_bounds = array<i64: 1, 128>}, {transform_indices = @transform_3, window_bounds = array<i64: 24, 128>}]} {
    %c0 = arith.constant 0 : index
    %c0_0 = arith.constant 0 : index
    %0 = vector.load %arg2[%c0, %c0_0] : memref<24x32xf32, #tpu.memory_space<vmem>>, vector<24x32xf32>
    %c0_1 = arith.constant 0 : index
    %c0_2 = arith.constant 0 : index
    %1 = vector.load %arg3[%c0_1, %c0_2] : memref<32x128xf32, #tpu.memory_space<vmem>>, vector<32x128xf32>
    %cst = arith.constant dense<0.000000e+00> : vector<24x128xf32>
    %2 = tpu.matmul %0, %1, %cst {dimension_numbers = #tpu.dot_dimension_numbers<[1], [0], [0], [1], [0, 0, 1, 1], [], []>} : vector<24x32xf32>, vector<32x128xf32>, vector<24x128xf32> -> vector<24x128xf32>
    %c0_3 = arith.constant 0 : index
    %c0_4 = arith.constant 0 : index
    %3 = vector.load %arg4[%c0_3, %c0_4] : memref<1x128xf32, #tpu.memory_space<vmem>>, vector<1x128xf32>
    %4 = vector.broadcast %3 : vector<1x128xf32> to vector<24x128xf32>
    %5 = arith.addf %2, %4 : vector<24x128xf32>
    %cst_5 = arith.constant 5.000000e-01 : f32
    %6 = vector.broadcast %cst_5 : f32 to vector<24x128xf32>
    %7 = arith.mulf %6, %5 : vector<24x128xf32>
    %cst_6 = arith.constant 0.707106769 : f32
    %8 = vector.broadcast %cst_6 : f32 to vector<24x128xf32>
    %9 = arith.mulf %5, %8 : vector<24x128xf32>
    %10 = math.erf %9 : vector<24x128xf32>
    %cst_7 = arith.constant 1.000000e+00 : f32
    %11 = vector.broadcast %cst_7 : f32 to vector<24x128xf32>
    %12 = arith.addf %11, %10 : vector<24x128xf32>
    %13 = arith.mulf %7, %12 : vector<24x128xf32>
    %c0_8 = arith.constant 0 : index
    %c0_9 = arith.constant 0 : index
    %14 = vector.load %arg5[%c0_8, %c0_9] : memref<24x128xf32, #tpu.memory_space<vmem>>, vector<24x128xf32>
    tpu.vector_store %arg5[%c0_8, %c0_9], %13 {strides = array<i32>} : memref<24x128xf32, #tpu.memory_space<vmem>>, vector<24x128xf32>,
    return
  }
  func.func @transform_0(%arg0: i32, %arg1: i32) -> (i32, i32) {
    %c0_i32 = arith.constant 0 : i32
    %c0_i32_0 = arith.constant 0 : i32
    return %arg1, %c0_i32 : i32, i32
  }
  func.func @transform_1(%arg0: i32, %arg1: i32) -> (i32, i32) {
    %c0_i32 = arith.constant 0 : i32
    %c0_i32_0 = arith.constant 0 : i32
    return %c0_i32, %arg0 : i32, i32
  }
  func.func @transform_2(%arg0: i32, %arg1: i32) -> (i32, i32) {
    %c0_i32 = arith.constant 0 : i32
    %c0_i32_0 = arith.constant 0 : i32
    return %c0_i32, %arg0 : i32, i32
  }
  func.func @transform_3(%arg0: i32, %arg1: i32) -> (i32, i32) {
    %c0_i32 = arith.constant 0 : i32
    return %arg1, %arg0 : i32, i32
  }
}

</mosaic_0001>

<llo_original>
// kernel: _vit_intermediate_impl.1
$region0: #{_vit_intermediate_impl.1}
  #allocation0 [shape = 'u32[]', space=smem, size = 0x4, offset = 0x4, fixed_abs, tag = 'smem constant byte address 0x4 - core index']
  #allocation1 [shape = 'u32[144,128]{1,0:T(1,128)}', space=vmem, size = 0x12000, scoped, tag = 'internal scratch']
  %s0 = inlined_call_operand.vmem [shape: f32[18,32], index: 0, kind: input, shape index: {}]
  %s1 = inlined_call_operand.vmem [shape: f32[32,128], index: 1, kind: input, shape index: {}]
  %s2 = inlined_call_operand.vmem [shape: f32[1,128], index: 2, kind: input, shape index: {}]
  %s3 = inlined_call_operand.vmem [shape: f32[18,128], index: 3, kind: output, shape index: {}]
  %s4 = sld [smem:[#allocation0]]
  $region22: #{_vit_intermediate_impl.1} parent=0
    _
  %s6 = ssub.s32 1, %s4
  %s7 = scalar_select 0, %s6, %s4
  // Predicated region
  $region2: #{_vit_intermediate_impl.1} parent=0 // pred_check
    _
  $region3: #{_vit_intermediate_impl.1} parent=0 // pred_check_branch
    %9 = sbr.rel (0) target = $region5
  $region4: #{_vit_intermediate_impl.1} parent=0 // pred_region
    _
  $region5: #{_vit_intermediate_impl.1} parent=0 // pred_fallthru
    _
  // Predicated region
  $region6: #{_vit_intermediate_impl.1} parent=0 // pred_check
    _
  $region7: #{_vit_intermediate_impl.1} parent=0 // pred_check_branch
    %11 = sbr.rel (0) target = $region9
  $region8: #{_vit_intermediate_impl.1} parent=0 // pred_region
    _
  $region9: #{_vit_intermediate_impl.1} parent=0 // pred_fallthru
    _
  // Predicated region
  $region10: #{_vit_intermediate_impl.1} parent=0 // pred_check
    _
  $region11: #{_vit_intermediate_impl.1} parent=0 // pred_check_branch
    %13 = sbr.rel (0) target = $region13
  $region12: #{_vit_intermediate_impl.1} parent=0 // pred_region
    _
  $region13: #{_vit_intermediate_impl.1} parent=0 // pred_fallthru
    _
  %v14 = vld [vmem:[%s0] sm:$0xff]
  %v15 = vld [vmem:[%s0 + $0x8] sm:$0xff]
  %v16 = vld [vmem:[%s0 + $0x10] sm:$0xff]
  %v17 = vld [vmem:[%s1] sm:$0xff]
  %v18 = vld [vmem:[%s1 + $0x8] sm:$0xff]
  %v19 = vld [vmem:[%s1 + $0x10] sm:$0xff]
  %v20 = vld [vmem:[%s1 + $0x18] sm:$0xff]
  %v21 = vld [vmem:[%s2] sm:$0x1]
  %v23 = vlaneseq
  %v24 = vshrl.u32 %v23, 7
  %v25 = vsub.s32 0, %v24
  %v26 = vrot.slane %v21, %v25
  %vm28 = vcmask 261120
  %v30 = vsel %vm28, %v14, 0
  %v33 = vsel %vm28, %v15, 0
  %v36 = vsel %vm28, %v16, 0
  %38 = vmatprep.subr.mxu0 0.0
  %39 = vmatpush1.msra.mxu0 0.0
  %40 = vmatprep.subr.mxu0 0.0
  %41 = vmatpush1.msra.mxu0 0.0
  %42 = vmatprep.subr.mxu0 0.0
  %43 = vmatpush1.msra.mxu0 0.0
  %44 = vmatprep.subr.mxu0 0.0
  %45 = vmatpush1.msra.mxu0 0.0
  %46 = vmatprep.subr.mxu0 0.0
  %47 = vmatpush1.msra.mxu0 0.0
  %48 = vmatprep.subr.mxu0 0.0
  %49 = vmatpush1.msra.mxu0 0.0
  %50 = vmatprep.subr.mxu0 0.0
  %51 = vmatpush1.msra.mxu0 0.0
  %52 = vmatprep.subr.mxu0 0.0
  %53 = vmatpush1.msra.mxu0 0.0
  %54 = vmatprep.subr.mxu0 0.0
  %55 = vmatpush1.msra.mxu0 0.0
  %56 = vmatprep.subr.mxu0 0.0
  %57 = vmatpush1.msra.mxu0 0.0
  %58 = vmatprep.subr.mxu0 0.0
  %59 = vmatpush1.msra.mxu0 0.0
  %60 = vmatprep.subr.mxu0 0.0
  %61 = vmatpush1.msra.mxu0 0.0
  %62 = vmatprep.subr.mxu0 0.0
  %63 = vmatpush1.msra.mxu0 %v20
  %64 = vmatprep.subr.mxu0 0.0
  %65 = vmatpush1.msra.mxu0 %v19
  %66 = vmatprep.subr.mxu0 0.0
  %67 = vmatpush1.msra.mxu0 %v18
  %68 = vmatprep.subr.mxu0 0.0
  %69 = vmatpush1.msra.mxu0 %v17
  %70 = vmatprep.subr.mxu0 0.0
  %71 = vmatpush2.msra.mxu0 0.0
  %72 = vmatprep.subr.mxu0 0.0
  %73 = vmatpush2.msra.mxu0 0.0
  %74 = vmatprep.subr.mxu0 0.0
  %75 = vmatpush2.msra.mxu0 0.0
  %76 = vmatprep.subr.mxu0 0.0
  %77 = vmatpush2.msra.mxu0 0.0
  %78 = vmatprep.subr.mxu0 0.0
  %79 = vmatpush2.msra.mxu0 0.0
  %80 = vmatprep.subr.mxu0 0.0
  %81 = vmatpush2.msra.mxu0 0.0
  %82 = vmatprep.subr.mxu0 0.0
  %83 = vmatpush2.msra.mxu0 0.0
  %84 = vmatprep.subr.mxu0 0.0
  %85 = vmatpush2.msra.mxu0 0.0
  %86 = vmatprep.subr.mxu0 0.0
  %87 = vmatpush2.msra.mxu0 0.0
  %88 = vmatprep.subr.mxu0 0.0
  %89 = vmatpush2.msra.mxu0 0.0
  %90 = vmatprep.subr.mxu0 0.0
  %91 = vmatpush2.msra.mxu0 0.0
  %92 = vmatprep.subr.mxu0 0.0
  %93 = vmatpush2.msra.mxu0 0.0
  %94 = vmatprep.subr.mxu0 0.0
  %95 = vmatpush2.msra.mxu0 0.0
  %96 = vmatprep.subr.mxu0 0.0
  %97 = vmatpush2.msra.mxu0 0.0
  %98 = vmatprep.subr.mxu0 0.0
  %99 = vmatpush2.msra.mxu0 0.0
  %100 = vmatprep.subr.mxu0 0.0
  %101 = vmatpush2.msra.mxu0 0.0
  %102 = vmatprep.mubr.f32.mxu0 0.0
  %103 = vmatmul.mubr.f32.gmra.mxu0 %v30
  %v104 = vpop.f32.mrf.mxu0
  %v105 = vadd.f32 %v26, %v104
  %v106 = vpop.f32.mrf.mxu0
  %107 = vmatprep.mubr.f32.mxu0 0.0
  %108 = vmatmul.mubr.f32.gmra.mxu0 %v33
  %v109 = vpop.f32.mrf.mxu0
  %v110 = vadd.f32 %v26, %v109
  %v111 = vpop.f32.mrf.mxu0
  %112 = vmatprep.mubr.f32.mxu0 0.0
  %113 = vmatmul.mubr.f32.gmra.mxu0 %v36
  %v114 = vpop.f32.mrf.mxu0
  %v115 = vadd.f32 %v26, %v114
  %v116 = vpop.f32.mrf.mxu0
  %117 = vdwg.mxu0
  %v118 = vmul.f32 %v105, 0.5
  %v119 = vmul.f32 %v110, 0.5
  %v120 = vmul.f32 %v115, 0.5
  %v121 = vmul.f32 %v105, 0.70710677
  %v122 = vmul.f32 %v110, 0.70710677
  %v123 = vmul.f32 %v115, 0.70710677
  %v124 = verf.f32.pop %v121
  %v125 = verf.f32.pop %v122
  %v126 = verf.f32.pop %v123
  %v127 = vadd.f32 %v124, 1.0
  %v128 = vadd.f32 %v125, 1.0
  %v129 = vadd.f32 %v126, 1.0
  %v130 = vmul.f32 %v118, %v127
  %v131 = vmul.f32 %v119, %v128
  %v132 = vmul.f32 %v120, %v129
  %133 = vst [vmem:[%s3] sm:$0xff] %v130
  %134 = vst [vmem:[%s3 + $0x8] sm:$0xff] %v131
  %135 = vst [vmem:[%s3 + $0x10] sm:$0xff] %v132
  // Predicated region
  $region14: #{_vit_intermediate_impl.1} parent=0 // pred_check
    _
  $region15: #{_vit_intermediate_impl.1} parent=0 // pred_check_branch
    %137 = sbr.rel (0) target = $region17
  $region16: #{_vit_intermediate_impl.1} parent=0 // pred_region
    _
  $region17: #{_vit_intermediate_impl.1} parent=0 // pred_fallthru
    _
  // Predicated region
  $region18: #{_vit_intermediate_impl.1} parent=0 // pred_check
    _
  $region19: #{_vit_intermediate_impl.1} parent=0 // pred_check_branch
    %139 = sbr.rel (0) target = $region21
  $region20: #{_vit_intermediate_impl.1} parent=0 // pred_region
    _
  $region21: #{_vit_intermediate_impl.1} parent=0 // pred_fallthru
    _

</llo_original>
